<compile_context>
chip_gen: v5e
topology: v5e:2x2
jax: 0.10.0
libtpu: 0.0.40
codegen_flags: <defaults>
</compile_context>

<pallas_src>
import jax
import jax.numpy as jnp
from jax.experimental import pallas as pl
from jax.experimental.pallas import tpu as pltpu


def _round_up(n, m):
    return ((n + m - 1) // m) * m


def _affine_kernel(s_ref, b_ref, x_ref, o_ref):
    """One fused elementwise affine pass: o = x * s + b.

    s_ref, b_ref : (1, TD)  composed effective scale / bias (compute dtype)
    x_ref        : (TB, TD) input tile
    o_ref        : (TB, TD) output tile
    """
    x = x_ref[...].astype(s_ref.dtype)
    o_ref[...] = (x * s_ref[...] + b_ref[...]).astype(o_ref.dtype)


def _device_kind():
    try:
        return jax.devices()[0].device_kind.lower()
    except Exception:
        return ""


def _vmem_capacity_bytes():
    try:
        return int(pltpu.get_tpu_info().vmem_capacity_bytes)
    except Exception:
        pass
    return (64 << 20) if "v7" in _device_kind() else (128 << 20)


def _compute_dtype_for(x_dtype):
    # bf16 VALU exists on v6e/v7x; keep f32 math on v5e/older or f32 inputs.
    if jnp.dtype(x_dtype) == jnp.dtype(jnp.bfloat16):
        kind = _device_kind()
        if ("v6" in kind) or ("v7" in kind):
            return jnp.bfloat16
    return jnp.float32


class SequentialFlowPallas:
    """JAX/Pallas analogue of iflow.model.container.SequentialFlow."""

    def __init__(self, log_scales, biases):
        # log_scales, biases: (L, D) stacked per-layer parameters.
        assert log_scales.shape == biases.shape and log_scales.ndim == 2
        self.log_scales = jnp.asarray(log_scales, jnp.float32)
        self.biases = jnp.asarray(biases, jnp.float32)
        self.num_layers = log_scales.shape[0]
        self.dim = log_scales.shape[1]

    # ---- chain composition (data-independent, vectorized over layers) ------
    def _compose(self, reverse, inds):
        """Fold the selected layers (in application order) into one affine.

        Returns eff_scale (D,), eff_bias (D,), logdet_delta (scalar) such that
        applying the chain equals x -> x * eff_scale + eff_bias and
        logpx -> logpx + logdet_delta.
        """
        if inds is None:
            order = (tuple(range(self.num_layers - 1, -1, -1)) if reverse
                     else tuple(range(self.num_layers)))
        else:
            # Matches the PyTorch container: user-provided inds are applied in
            # the given order regardless of `reverse`.  Must be static ints.
            order = inds
        idx = jnp.asarray(order, jnp.int32)
        ls = self.log_scales[idx]          # (n, D), application order
        bs = self.biases[idx]
        total = jnp.sum(ls, axis=0)        # (D,)
        # sum of log-scales of layers applied AFTER layer j
        suffix = total[None, :] - jnp.cumsum(ls, axis=0)
        if not reverse:
            eff_s = jnp.exp(total)
            eff_b = jnp.sum(bs * jnp.exp(suffix), axis=0)
            logdet = -jnp.sum(ls)
        else:
            eff_s = jnp.exp(-total)
            eff_b = -jnp.sum(bs * jnp.exp(-(ls + suffix)), axis=0)
            logdet = jnp.sum(ls)
        return eff_s, eff_b, logdet

    # ---- Pallas launch ------------------------------------------------------
    def _run_x(self, x, eff_s, eff_b):
        assert x.ndim == 2
        B, D = x.shape
        out_dtype = x.dtype
        cdtype = _compute_dtype_for(x.dtype)

        # Lane folding for small D: (B, D) -> (B/k, k*D), copy-free reshape.
        fold = 1
        if D < 128 and 128 % D == 0:
            k = 128 // D
            if B % k == 0 and B >= k:
                fold = k
        B_rows, D_cols = B // fold, D * fold
        x2 = x if fold == 1 else x.reshape(B_rows, D_cols)
        s_row = eff_s if fold == 1 else jnp.tile(eff_s, fold)
        b_row = eff_b if fold == 1 else jnp.tile(eff_b, fold)
        s2 = s_row.reshape(1, D_cols).astype(cdtype)
        b2 = b_row.reshape(1, D_cols).astype(cdtype)

        # Generation-aware VMEM / tile budget.
        vmem_cap = _vmem_capacity_bytes()
        vmem_limit = int(min(3 * vmem_cap // 4, 96 << 20))
        tile_budget = max(1 << 20, vmem_limit // 8)   # per in/out tile stream
        itemsize = jnp.dtype(x.dtype).itemsize

        # Feature-axis blocking only when even 8 rows would blow the budget.
        if 8 * D_cols * itemsize > tile_budget and D_cols % 128 == 0:
            TD = max(128, (tile_budget // (8 * itemsize)) // 128 * 128)
        else:
            TD = D_cols
        # TODO(synk): a huge ragged D (not a multiple of 128) that overflows the
        # tile budget would still need a padded feature split; not needed here.

        # Batch tile: fill the byte budget; keep >= 2 grid steps when possible
        # so both v7x TensorCores get work.
        TB = max(8, (tile_budget // max(1, TD * itemsize)) // 8 * 8)
        if B_rows > 8:
            TB = min(TB, max(8, _round_up(-(-B_rows // 2), 8)))
        if TB >= B_rows:
            TB = B_rows                     # full-extent block

        grid = (pl.cdiv(B_rows, TB), pl.cdiv(D_cols, TD))
        y2 = pl.pallas_call(
            _affine_kernel,
            grid=grid,
            in_specs=[
                pl.BlockSpec((1, TD), lambda i, j: (0, j)),    # eff scale
                pl.BlockSpec((1, TD), lambda i, j: (0, j)),    # eff bias
                pl.BlockSpec((TB, TD), lambda i, j: (i, j)),   # x tile
            ],
            out_specs=pl.BlockSpec((TB, TD), lambda i, j: (i, j)),
            out_shape=jax.ShapeDtypeStruct((B_rows, D_cols), out_dtype),
            compiler_params=pltpu.CompilerParams(
                dimension_semantics=("parallel", "parallel"),
                vmem_limit_bytes=vmem_limit),
        )(s2, b2, x2)

        return y2 if fold == 1 else y2.reshape(B, D)

    # ---- container-style forward --------------------------------------------
    def forward(self, x, logpx=None, context=None, reverse=False, inds=None):
        # TODO(synk): `context` is accepted but unused — the affine flow layers
        # instantiated here are context-free (as in the original container when
        # its layers ignore context).
        eff_s, eff_b, logdet = self._compose(
            bool(reverse),
            tuple(int(i) for i in inds) if inds is not None else None)
        y = self._run_x(x, eff_s, eff_b)
        if logpx is None:
            return y
        # Log-det is data-independent -> scalar add in the wrapper.
        return y, logpx + logdet

    __call__ = forward


if __name__ == "__main__":
    key = jax.random.PRNGKey(0)
    k_ls, k_b, k_x, k_lp, k_ls2, k_b2, k_x2 = jax.random.split(key, 7)

    # ---- primary test: small D triggers the lane-folded (copy-free) path ----
    B, D, L = 8, 32, 3
    log_scales = 0.1 * jax.random.normal(k_ls, (L, D), jnp.float32)
    biases = jax.random.normal(k_b, (L, D), jnp.float32)
    flow = SequentialFlowPallas(log_scales, biases)

    x = jax.random.normal(k_x, (B, D), jnp.float32)
    logpx = jax.random.normal(k_lp, (B, 1), jnp.float32)

    y = flow(x)                                   # x only
    y2, lp2 = flow(x, logpx)                      # (x, logpx)
    x_rec, lp_rec = flow(y2, lp2, reverse=True)   # reverse inverts forward
    y_sub = flow(x, inds=[0, 2])                  # inds-subset, forward order

    # ---- secondary test: ragged B and D exercise the no-pad partial-block path
    B3, D3, L3 = 10, 48, 2
    log_scales3 = 0.1 * jax.random.normal(k_ls2, (L3, D3), jnp.float32)
    biases3 = jax.random.normal(k_b2, (L3, D3), jnp.float32)
    flow3 = SequentialFlowPallas(log_scales3, biases3)
    x3 = jax.random.normal(k_x2, (B3, D3), jnp.float32)
    y3 = flow3(x3)

    jax.block_until_ready((y, y2, lp2, x_rec, lp_rec, y_sub, y3))

    # Pure-JAX reference of the chained (layer-by-layer) semantics.
    x_ref, lp_ref = x, logpx
    for i in range(L):
        x_ref = x_ref * jnp.exp(log_scales[i]) + biases[i]
        lp_ref = lp_ref - jnp.sum(log_scales[i])
    x_sub_ref = x
    for i in (0, 2):
        x_sub_ref = x_sub_ref * jnp.exp(log_scales[i]) + biases[i]
    x3_ref = x3
    for i in range(L3):
        x3_ref = x3_ref * jnp.exp(log_scales3[i]) + biases3[i]

    assert jnp.allclose(y, x_ref, atol=1e-5), "forward (x-only) mismatch"
    assert jnp.allclose(y2, x_ref, atol=1e-5), "forward x mismatch"
    assert jnp.allclose(lp2, lp_ref, atol=1e-5), "forward logpx mismatch"
    assert jnp.allclose(x_rec, x, atol=1e-4), "reverse did not invert forward"
    assert jnp.allclose(lp_rec, logpx, atol=1e-4), "reverse logpx mismatch"
    assert jnp.allclose(y_sub, x_sub_ref, atol=1e-5), "inds-subset mismatch"
    assert jnp.allclose(y3, x3_ref, atol=1e-5), "ragged-shape mismatch"

    print("KERNEL_OK")
</pallas_src>

<mosaic_0001>
module attributes {stable_mosaic.version = 11 : i64} {
  func.func @_affine_kernel(%arg0: i32, %arg1: i32, %arg2: memref<1x128xf32, #tpu.memory_space<vmem>>, %arg3: memref<1x128xf32, #tpu.memory_space<vmem>>, %arg4: memref<2x128xf32, #tpu.memory_space<vmem>>, %arg5: memref<2x128xf32, #tpu.memory_space<vmem>>) attributes {dimension_semantics = [#tpu.dimension_semantics<parallel>, #tpu.dimension_semantics<parallel>], iteration_bounds = array<i64: 1, 1>, scalar_prefetch = 0 : i64, scratch_operands = 0 : i64, tpu.core_type = #tpu.core_type<tc>, window_params = [{transform_indices = @transform_0, window_bounds = array<i64: 1, 128>}, {transform_indices = @transform_1, window_bounds = array<i64: 1, 128>}, {transform_indices = @transform_2, window_bounds = array<i64: 2, 128>}, {transform_indices = @transform_3, window_bounds = array<i64: 2, 128>}]} {
    %c0 = arith.constant 0 : index
    %c0_0 = arith.constant 0 : index
    %0 = vector.load %arg4[%c0, %c0_0] : memref<2x128xf32, #tpu.memory_space<vmem>>, vector<2x128xf32>
    %c0_1 = arith.constant 0 : index
    %c0_2 = arith.constant 0 : index
    %1 = vector.load %arg2[%c0_1, %c0_2] : memref<1x128xf32, #tpu.memory_space<vmem>>, vector<1x128xf32>
    %2 = vector.broadcast %1 : vector<1x128xf32> to vector<2x128xf32>
    %3 = arith.mulf %0, %2 : vector<2x128xf32>
    %c0_3 = arith.constant 0 : index
    %c0_4 = arith.constant 0 : index
    %4 = vector.load %arg3[%c0_3, %c0_4] : memref<1x128xf32, #tpu.memory_space<vmem>>, vector<1x128xf32>
    %5 = vector.broadcast %4 : vector<1x128xf32> to vector<2x128xf32>
    %6 = arith.addf %3, %5 : vector<2x128xf32>
    %c0_5 = arith.constant 0 : index
    %c0_6 = arith.constant 0 : index
    %7 = vector.load %arg5[%c0_5, %c0_6] : memref<2x128xf32, #tpu.memory_space<vmem>>, vector<2x128xf32>
    tpu.vector_store %arg5[%c0_5, %c0_6], %6 {strides = array<i32>} : memref<2x128xf32, #tpu.memory_space<vmem>>, vector<2x128xf32>,
    return
  }
  func.func @transform_0(%arg0: i32, %arg1: i32) -> (i32, i32) {
    %c0_i32 = arith.constant 0 : i32
    %c0_i32_0 = arith.constant 0 : i32
    return %c0_i32, %arg1 : i32, i32
  }
  func.func @transform_1(%arg0: i32, %arg1: i32) -> (i32, i32) {
    %c0_i32 = arith.constant 0 : i32
    %c0_i32_0 = arith.constant 0 : i32
    return %c0_i32, %arg1 : i32, i32
  }
  func.func @transform_2(%arg0: i32, %arg1: i32) -> (i32, i32) {
    %c0_i32 = arith.constant 0 : i32
    return %arg0, %arg1 : i32, i32
  }
  func.func @transform_3(%arg0: i32, %arg1: i32) -> (i32, i32) {
    %c0_i32 = arith.constant 0 : i32
    return %arg0, %arg1 : i32, i32
  }
}

</mosaic_0001>

<llo_original>
// kernel: tpu_custom_call.1
$region0: #{tpu_custom_call.1}
  #allocation0 [shape = 'u32[]', space=smem, size = 0x4, offset = 0x4, fixed_abs, tag = 'smem constant byte address 0x4 - core index']
  #allocation1 [shape = 'u32[72,128]{1,0:T(1,128)}', space=vmem, size = 0x9000, scoped, tag = 'internal scratch']
  %s0 = inlined_call_operand.hbm [shape: f32[1,128], index: 0, kind: input, shape index: {}]
  %s1 = inlined_call_operand.hbm [shape: f32[1,128], index: 1, kind: input, shape index: {}]
  %s2 = inlined_call_operand.hbm [shape: f32[2,128], index: 2, kind: input, shape index: {}]
  %s3 = inlined_call_operand.hbm [shape: f32[2,128], index: 3, kind: output, shape index: {}]
  %s4 = sld [smem:[#allocation0]]
  $region34: #{tpu_custom_call.1} parent=0
    _
  %s6 = ssub.s32 1, %s4
  %s7 = scalar_select 0, %s6, %s4
  $region1: #{tpu_custom_call.1} parent=0
    #allocation2 [shape = 'u8[512]{0}', space=vmem, size = 0x400, scoped, tag = 'input window, operand 0, single buffered']
    #allocation3 [shape = 's32[1]{0}', space=sflag, size = 0x4, scoped, tag = 'scoped memory for tpu_custom_call.1']
    #allocation4 [shape = 's32[1]{0}', space=sflag, size = 0x4, scoped, tag = 'scoped memory for tpu_custom_call.1']
    #allocation5 [shape = 'u8[512]{0}', space=vmem, size = 0x400, scoped, tag = 'input window, operand 1, single buffered']
    #allocation6 [shape = 's32[1]{0}', space=sflag, size = 0x4, scoped, tag = 'scoped memory for tpu_custom_call.1']
    #allocation7 [shape = 'u8[1024]{0}', space=vmem, size = 0x400, scoped, tag = 'input window, operand 2, single buffered']
    #allocation8 [shape = 'u8[1024]{0}', space=vmem, size = 0x400, scoped, tag = 'output window, operand 0, single buffered']
    %8 = vsyncpa [#allocation3], 0
    %9 = vsyncpa [#allocation6], 0
    %10 = vsyncpa [#allocation4], 0
    // Predicated region
    $region2: #{tpu_custom_call.1} parent=1 // pred_check
      _
    $region3: #{tpu_custom_call.1} parent=1 // pred_check_branch
      %12 = sbr.rel (0) target = $region5
    $region4: #{tpu_custom_call.1} parent=1 // pred_region
      %14 = vsyncadd [#allocation3], 0
      %s16 = sshll.u32 %s0, 4
      %s17 = int_to_ptr.hbm [resolvable:$true] %s16
      %s18 = sshll.u32 [#allocation2], 4
      %s19 = int_to_ptr.vmem [resolvable:$true] %s18
      %21 = dma.hbm_to_vmem [thread:$0]  %s17, 16, %s19, [#allocation3]
    $region5: #{tpu_custom_call.1} parent=1 // pred_fallthru
      _
    // Predicated region
    $region6: #{tpu_custom_call.1} parent=1 // pred_check
      _
    $region7: #{tpu_custom_call.1} parent=1 // pred_check_branch
      %23 = sbr.rel (0) target = $region9
    $region8: #{tpu_custom_call.1} parent=1 // pred_region
      %25 = vsyncadd [#allocation6], 0
      %s27 = sshll.u32 %s1, 4
      %s28 = int_to_ptr.hbm [resolvable:$true] %s27
      %s29 = sshll.u32 [#allocation5], 4
      %s30 = int_to_ptr.vmem [resolvable:$true] %s29
      %32 = dma.hbm_to_vmem [thread:$0]  %s28, 16, %s30, [#allocation6]
    $region9: #{tpu_custom_call.1} parent=1 // pred_fallthru
      _
    // Predicated region
    $region10: #{tpu_custom_call.1} parent=1 // pred_check
      _
    $region11: #{tpu_custom_call.1} parent=1 // pred_check_branch
      %34 = sbr.rel (0) target = $region13
    $region12: #{tpu_custom_call.1} parent=1 // pred_region
      %36 = vsyncadd [#allocation6], 0
      %s38 = sshll.u32 %s2, 4
      %s39 = int_to_ptr.hbm [resolvable:$true] %s38
      %s40 = sshll.u32 [#allocation7], 4
      %s41 = int_to_ptr.vmem [resolvable:$true] %s40
      %43 = dma.hbm_to_vmem [thread:$0]  %s39, 32, %s41, [#allocation6]
    $region13: #{tpu_custom_call.1} parent=1 // pred_fallthru
      _
    // Predicated region
    $region14: #{tpu_custom_call.1} parent=1 // pred_check
      _
    $region15: #{tpu_custom_call.1} parent=1 // pred_check_branch
      %45 = sbr.rel (0) target = $region17
    $region16: #{tpu_custom_call.1} parent=1 // pred_region
      %47 = dma.done [#allocation3], 16
    $region17: #{tpu_custom_call.1} parent=1 // pred_fallthru
      _
    // Predicated region
    $region18: #{tpu_custom_call.1} parent=1 // pred_check
      _
    $region19: #{tpu_custom_call.1} parent=1 // pred_check_branch
      %49 = sbr.rel (0) target = $region21
    $region20: #{tpu_custom_call.1} parent=1 // pred_region
      %51 = dma.done [#allocation6], 16
    $region21: #{tpu_custom_call.1} parent=1 // pred_fallthru
      _
    // Predicated region
    $region22: #{tpu_custom_call.1} parent=1 // pred_check
      _
    $region23: #{tpu_custom_call.1} parent=1 // pred_check_branch
      %53 = sbr.rel (0) target = $region25
    $region24: #{tpu_custom_call.1} parent=1 // pred_region
      %55 = dma.done [#allocation6], 32
    $region25: #{tpu_custom_call.1} parent=1 // pred_fallthru
      _
    %v56 = vld [vmem:[#allocation7] sm:$0x3]
    %v57 = vld [vmem:[#allocation2] sm:$0x1]
    %v59 = vperm.slane %v57, 0
    %v61 = vmul.f32 %v56, %v59
    %v62 = vld [vmem:[#allocation5] sm:$0x1]
    %v64 = vperm.slane %v62, 0
    %v66 = vadd.f32 %v61, %v64
    %67 = vst [vmem:[#allocation8] sm:$0x3] %v66
    // Predicated region
    $region26: #{tpu_custom_call.1} parent=1 // pred_check
      _
    $region27: #{tpu_custom_call.1} parent=1 // pred_check_branch
      %69 = sbr.rel (0) target = $region29
    $region28: #{tpu_custom_call.1} parent=1 // pred_region
      %71 = vsyncadd [#allocation4], 0
      %s73 = sshll.u32 [#allocation8], 4
      %s74 = int_to_ptr.vmem [resolvable:$true] %s73
      %s75 = sshll.u32 %s3, 4
      %s76 = int_to_ptr.hbm [resolvable:$true] %s75
      %78 = dma.vmem_to_hbm [thread:$0]  %s74, 32, %s76, [#allocation4]
    $region29: #{tpu_custom_call.1} parent=1 // pred_fallthru
      _
    // Predicated region
    $region30: #{tpu_custom_call.1} parent=1 // pred_check
      _
    $region31: #{tpu_custom_call.1} parent=1 // pred_check_branch
      %80 = sbr.rel (0) target = $region33
    $region32: #{tpu_custom_call.1} parent=1 // pred_region
      %82 = dma.done [#allocation4], 32
    $region33: #{tpu_custom_call.1} parent=1 // pred_fallthru
      _
    %83 = vsyncpa [#allocation3], 1
    %84 = vsyncpa [#allocation6], 1
    %85 = vsyncpa [#allocation4], 1

</llo_original>
